<compile_context>
chip_gen: v5e
topology: v5e:2x2
jax: 0.10.0
libtpu: 0.0.40
codegen_flags: <defaults>
</compile_context>

<pallas_src>
import functools

import jax
import jax.numpy as jnp
import numpy as np
from jax.experimental import pallas as pl
from jax.experimental.pallas import tpu as pltpu

EPS = 1e-5  # nn.BatchNorm1d default eps


# ---------------------------------------------------------------------------
# helpers shared by the kernels and the pure-JAX reference
# ---------------------------------------------------------------------------
def _activation(x, act_fx):
    if act_fx == "relu":
        return jnp.maximum(x, 0.0)
    if act_fx == "leaky_relu":
        return jnp.where(x > 0, x, 0.01 * x)
    if act_fx == "selu":
        alpha = 1.6732632423543772
        scale = 1.0507009873554805
        return scale * jnp.where(x > 0, x, alpha * (jnp.exp(x) - 1.0))
    if act_fx == "none":
        return x
    raise ValueError(f"unknown activation {act_fx!r}")


def _nbytes(*arrs):
    return sum(int(np.prod(s)) * np.dtype(d).itemsize for s, d in arrs)


def _vmem_cap_bytes():
    try:
        return int(getattr(pltpu.get_tpu_info(), "vmem_capacity_bytes", 64 << 20))
    except Exception:  # not on TPU / API unavailable: assume the smallest gen
        return 64 << 20


def _compiler_params(block_bytes, scratch_bytes=0):
    cap = _vmem_cap_bytes()
    limit = int(2 * block_bytes + scratch_bytes + (8 << 20))  # 2x for dbl-buffering
    limit = max(limit, 32 << 20)
    limit = min(limit, int(0.75 * cap))          # generation-aware ceiling
    return pltpu.CompilerParams(
        dimension_semantics=("parallel",),       # batch blocks split across TCs (v7x)
        vmem_limit_bytes=limit,
    )


def _batch_stats(y_f32, inv_cnt):
    """Per-batch (mean, M2) partials in f32 -> (C, 2).  M2 = sum((y-mean)^2)."""
    mean = jnp.sum(y_f32, axis=1, keepdims=True) * inv_cnt
    m2 = jnp.sum(jnp.square(y_f32 - mean), axis=1, keepdims=True)
    return jnp.concatenate([mean, m2], axis=1)


def _combine_bn(stats, gamma, beta, count_per_batch):
    """Parallel/Welford combine of per-batch (mean, M2) partials.

    stats: (N, C, 2).  Returns BN-affine-folded (scale, shift), each (C, 1) f32.
    """
    mean_b = stats[:, :, 0]                                   # (N, C)
    m2_b = stats[:, :, 1]
    n_b = stats.shape[0]
    mean = jnp.mean(mean_b, axis=0)                           # (C,)
    m2 = jnp.sum(m2_b, axis=0) + count_per_batch * jnp.sum(
        jnp.square(mean_b - mean), axis=0)
    var = m2 / (n_b * count_per_batch)                        # biased (training BN)
    inv = jax.lax.rsqrt(var + EPS)
    scale = gamma * inv
    shift = beta - mean * scale
    return (scale.reshape(-1, 1).astype(jnp.float32),
            shift.reshape(-1, 1).astype(jnp.float32))


def _pick_batch_block(N, per_batch_bytes, budget_bytes=4 << 20, max_nb=8):
    nb = 1
    for cand in range(2, min(N, max_nb) + 1):
        if N % cand == 0 and cand * per_batch_bytes <= budget_bytes:
            nb = cand
    return nb


# ---------------------------------------------------------------------------
# Stage 1: fused [unit-1 1x1 conv ; shortcut 1x1 conv] + per-batch BN partials
# ---------------------------------------------------------------------------
def _stage1_kernel(x_ref, wcat_ref, bcat_ref, ycat_ref, stats_ref,
                   *, NB, L, matmul_dtype):
    w = wcat_ref[...]                                         # (Ccat, Cin) matmul dt
    b = bcat_ref[...]                                         # (Ccat, 1)  f32
    inv_L = 1.0 / L
    for nb in range(NB):
        x = x_ref[nb].astype(matmul_dtype)                    # (Cin, L)
        y = jnp.dot(w, x, preferred_element_type=jnp.float32) + b   # (Ccat, L) f32
        ycat_ref[nb] = y.astype(ycat_ref.dtype)               # bf16 HBM intermediate
        stats_ref[nb] = _batch_stats(y, inv_L)                # f32 partials pre-cast


# ---------------------------------------------------------------------------
# Stage 2: BN1 + act, dilated 'same' conv as K accumulating MXU matmuls fed
#          from a lane-aligned halo scratch, per-batch BN partials of result.
# ---------------------------------------------------------------------------
def _stage2_kernel(ycat_ref, scale1_ref, shift1_ref, w2_ref, b2_ref,
                   y2_ref, stats_ref, hp_ref,
                   *, NB, L, K, d_rate, off, pad_left, pad_right, act_fx):
    base = off - pad_left
    rows = hp_ref.shape[0]
    # Zero ONLY the tiny halo columns, every step.  (Per-step, not once under
    # program_id==0: the grid axis is 'parallel', so relying on cross-step
    # scratch persistence would race under megacore splitting on v7x.)
    if pad_left > 0:
        hp_ref[:, base:off] = jnp.zeros((rows, pad_left), hp_ref.dtype)
    if pad_right > 0:
        hp_ref[:, off + L:off + L + pad_right] = jnp.zeros(
            (rows, pad_right), hp_ref.dtype)

    scale1 = scale1_ref[...]                                  # (O, 1) f32
    shift1 = shift1_ref[...]
    b2 = b2_ref[...]                                          # (O, 1) f32
    w2_taps = [w2_ref[j] for j in range(K)]                   # K x (O, O), hoisted
    inv_L = 1.0 / L
    for nb in range(NB):
        y1 = ycat_ref[nb].astype(jnp.float32)                 # (O, L) f32 BN math
        h1 = _activation(y1 * scale1 + shift1, act_fx)
        # Lane-aligned (off % 128 == 0), unmasked store into the halo scratch.
        hp_ref[:, off:off + L] = h1.astype(hp_ref.dtype)
        # K unrolled accumulating matmuls — no (K*O, L) concatenated temporary.
        acc = jnp.dot(w2_taps[0], hp_ref[:, base:base + L],
                      preferred_element_type=jnp.float32)
        for j in range(1, K):
            s = base + j * d_rate
            acc = acc + jnp.dot(w2_taps[j], hp_ref[:, s:s + L],
                                preferred_element_type=jnp.float32)
        y2 = acc + b2                                          # (O, L) f32
        y2_ref[nb] = y2.astype(y2_ref.dtype)
        stats_ref[nb] = _batch_stats(y2, inv_L)


# ---------------------------------------------------------------------------
# Stage 3: BN2 + act, shortcut BN (or identity), residual add, final act.
# ---------------------------------------------------------------------------
def _stage3_kernel(y2_ref, rsrc_ref, scale2_ref, shift2_ref, *rest,
                   NB, act_fx, use_shortcut):
    o_ref = rest[-1]
    scale2 = scale2_ref[...]
    shift2 = shift2_ref[...]
    if use_shortcut:
        scale_s = rest[0][...]
        shift_s = rest[1][...]
    for nb in range(NB):
        h2 = _activation(y2_ref[nb].astype(jnp.float32) * scale2 + shift2, act_fx)
        r = rsrc_ref[nb].astype(jnp.float32)
        if use_shortcut:
            r = r * scale_s + shift_s                          # BN of shortcut conv
        o_ref[nb] = _activation(h2 + r, act_fx)


# ---------------------------------------------------------------------------
# wrapper
# ---------------------------------------------------------------------------
def resnet_block_forward(x, params, *, conv_kernel, d_rate, act_fx,
                         matmul_dtype=jnp.bfloat16,
                         interstage_dtype=jnp.bfloat16,
                         batch_block=None):
    """x: (N, Cin, L) float32 -> (N, O, L) float32 (PyTorch NCL convention)."""
    N, Cin, L = x.shape
    O = params["w1"].shape[0]
    K = conv_kernel
    use_shortcut = (Cin != O)
    f32 = jnp.float32

    def getp(name, default):
        v = params.get(name)
        return default if v is None else v

    ones_O, zeros_O = jnp.ones((O,), f32), jnp.zeros((O,), f32)
    g1, be1 = getp("g1", ones_O), getp("be1", zeros_O)
    g2, be2 = getp("g2", ones_O), getp("be2", zeros_O)
    gs, bes = getp("gs", ones_O), getp("bes", zeros_O)

    # Pad out-channels to a multiple of 8 when the shortcut is active so the
    # stacked ycat slab can always be DMA'd half-at-a-time (padded channels
    # stay exactly zero end-to-end and are sliced off at the end).
    Op = O if (not use_shortcut or O % 8 == 0) else ((O + 7) // 8) * 8
    po = Op - O

    def padO(a, value=0.0):
        if po == 0:
            return a
        return jnp.pad(a, [(0, po)] + [(0, 0)] * (a.ndim - 1), constant_values=value)

    # ---- tiny one-time weight preprocessing (no big-tensor transposes) ------
    w1 = padO(params["w1"][:, :, 0])                          # (Op, Cin)
    b1 = padO(params["b1"]).reshape(-1, 1)
    g1p, be1p = padO(g1, 1.0), padO(be1)
    w2 = params["w2"]                                         # (O, O, K)
    if po:
        w2 = jnp.pad(w2, ((0, po), (0, po), (0, 0)))
    w2taps = jnp.transpose(w2, (2, 0, 1)).astype(matmul_dtype)  # (K, Op, Op)
    b2 = padO(params["b2"]).reshape(-1, 1)
    g2p, be2p = padO(g2, 1.0), padO(be2)

    if use_shortcut:
        ws = padO(params["ws"][:, :, 0])
        bs = padO(params["bs"]).reshape(-1, 1)
        gsp, besp = padO(gs, 1.0), padO(bes)
        wcat = jnp.concatenate([w1, ws], axis=0).astype(matmul_dtype)   # (2Op, Cin)
        bcat = jnp.concatenate([b1, bs], axis=0)
        gcat = jnp.concatenate([g1p, gsp], axis=0)
        becat = jnp.concatenate([be1p, besp], axis=0)
    else:
        wcat = w1.astype(matmul_dtype)
        bcat = b1
        gcat, becat = g1p, be1p
    Ccat = wcat.shape[0]

    pad_total = d_rate * (K - 1)
    pad_left = pad_total // 2               # PyTorch 'same': extra pad on the right
    pad_right = pad_total - pad_left
    off = 0 if pad_left == 0 else ((pad_left + 127) // 128) * 128  # lane-aligned
    hp_width = off + L + pad_right

    mm_it = np.dtype(matmul_dtype).itemsize
    is_it = np.dtype(interstage_dtype).itemsize

    # ---- batch blocking (amortize per-step overhead for small channels) -----
    per_batch = max(
        _nbytes(((Cin, L), f32), ((Ccat, L), interstage_dtype), ((Ccat, 2), f32)),
        _nbytes(((Op, L), interstage_dtype), ((Op, L), interstage_dtype),
                ((Op, 2), f32)),
        _nbytes(((Op, L), interstage_dtype), ((Op, L), f32), ((Op, L), f32)),
    )
    NB = batch_block if batch_block is not None else _pick_batch_block(N, per_batch)
    assert N % NB == 0, "batch_block must divide the batch size"
    grid = (N // NB,)

    # ---- stage 1: fused 1x1 convs + per-batch BN partials --------------------
    s1_blocks = _nbytes(((NB, Cin, L), f32), ((Ccat, Cin), matmul_dtype),
                        ((Ccat, 1), f32), ((NB, Ccat, L), interstage_dtype),
                        ((NB, Ccat, 2), f32))
    cost1 = pl.CostEstimate(
        flops=2 * N * Ccat * Cin * L + 6 * N * Ccat * L,
        transcendentals=0,
        bytes_accessed=N * Cin * L * 4 + N * Ccat * L * is_it
        + Ccat * Cin * mm_it + N * Ccat * 2 * 4)
    ycat, stats1 = pl.pallas_call(
        functools.partial(_stage1_kernel, NB=NB, L=L, matmul_dtype=matmul_dtype),
        grid=grid,
        in_specs=[
            pl.BlockSpec((NB, Cin, L), lambda n: (n, 0, 0)),
            pl.BlockSpec((Ccat, Cin), lambda n: (0, 0)),
            pl.BlockSpec((Ccat, 1), lambda n: (0, 0)),
        ],
        out_specs=[
            pl.BlockSpec((NB, Ccat, L), lambda n: (n, 0, 0)),
            pl.BlockSpec((NB, Ccat, 2), lambda n: (n, 0, 0)),
        ],
        out_shape=[
            jax.ShapeDtypeStruct((N, Ccat, L), interstage_dtype),
            jax.ShapeDtypeStruct((N, Ccat, 2), f32),
        ],
        compiler_params=_compiler_params(s1_blocks),
        cost_estimate=cost1,
    )(x, wcat, bcat)

    # tiny host-side Welford combine of the per-batch partials (overlapped by XLA)
    scale_cat, shift_cat = _combine_bn(stats1, gcat, becat, L)
    scale1, shift1 = scale_cat[:Op], shift_cat[:Op]
    if use_shortcut:
        scale_s, shift_s = scale_cat[Op:], shift_cat[Op:]

    # ---- stage 2: BN1+act, dilated conv (K accumulating matmuls), BN partials
    s2_blocks = _nbytes(((NB, Op, L), interstage_dtype), ((Op, 1), f32),
                        ((Op, 1), f32), ((K, Op, Op), matmul_dtype), ((Op, 1), f32),
                        ((NB, Op, L), interstage_dtype), ((NB, Op, 2), f32))
    s2_scratch = _nbytes(((Op, hp_width), matmul_dtype))
    cost2 = pl.CostEstimate(
        flops=2 * N * K * Op * Op * L + 12 * N * Op * L,
        transcendentals=(N * Op * L) if act_fx == "selu" else 0,
        bytes_accessed=2 * N * Op * L * is_it + K * Op * Op * mm_it + N * Op * 2 * 4)
    y2, stats2 = pl.pallas_call(
        functools.partial(_stage2_kernel, NB=NB, L=L, K=K, d_rate=d_rate,
                          off=off, pad_left=pad_left, pad_right=pad_right,
                          act_fx=act_fx),
        grid=grid,
        in_specs=[
            pl.BlockSpec((NB, Op, L), lambda n: (n, 0, 0)),   # conv half of ycat only
            pl.BlockSpec((Op, 1), lambda n: (0, 0)),
            pl.BlockSpec((Op, 1), lambda n: (0, 0)),
            pl.BlockSpec((K, Op, Op), lambda n: (0, 0, 0)),
            pl.BlockSpec((Op, 1), lambda n: (0, 0)),
        ],
        out_specs=[
            pl.BlockSpec((NB, Op, L), lambda n: (n, 0, 0)),
            pl.BlockSpec((NB, Op, 2), lambda n: (n, 0, 0)),
        ],
        out_shape=[
            jax.ShapeDtypeStruct((N, Op, L), interstage_dtype),
            jax.ShapeDtypeStruct((N, Op, 2), f32),
        ],
        scratch_shapes=[pltpu.VMEM((Op, hp_width), matmul_dtype)],
        compiler_params=_compiler_params(s2_blocks, s2_scratch),
        cost_estimate=cost2,
    )(ycat, scale1, shift1, w2taps, b2)

    scale2p, shift2p = _combine_bn(stats2, g2p, be2p, L)

    # ---- stage 3: BN2 + act, shortcut BN / identity, residual add, act -------
    if use_shortcut:
        rsrc = ycat
        r_spec = pl.BlockSpec((NB, Op, L), lambda n: (n, 1, 0))  # shortcut half only
        r_dtype = interstage_dtype
        extra_in = (scale_s, shift_s)
        extra_specs = [pl.BlockSpec((Op, 1), lambda n: (0, 0)),
                       pl.BlockSpec((Op, 1), lambda n: (0, 0))]
    else:
        rsrc = x                                               # identity residual
        r_spec = pl.BlockSpec((NB, Op, L), lambda n: (n, 0, 0))
        r_dtype = x.dtype
        extra_in = ()
        extra_specs = []

    s3_blocks = _nbytes(((NB, Op, L), interstage_dtype), ((NB, Op, L), r_dtype),
                        ((Op, 1), f32), ((Op, 1), f32), ((NB, Op, L), f32))
    cost3 = pl.CostEstimate(
        flops=8 * N * Op * L,
        transcendentals=(2 * N * Op * L) if act_fx == "selu" else 0,
        bytes_accessed=N * Op * L * (is_it + np.dtype(r_dtype).itemsize + 4))
    out = pl.pallas_call(
        functools.partial(_stage3_kernel, NB=NB, act_fx=act_fx,
                          use_shortcut=use_shortcut),
        grid=grid,
        in_specs=[pl.BlockSpec((NB, Op, L), lambda n: (n, 0, 0)),
                  r_spec,
                  pl.BlockSpec((Op, 1), lambda n: (0, 0)),
                  pl.BlockSpec((Op, 1), lambda n: (0, 0))] + extra_specs,
        out_specs=pl.BlockSpec((NB, Op, L), lambda n: (n, 0, 0)),
        out_shape=jax.ShapeDtypeStruct((N, Op, L), f32),
        compiler_params=_compiler_params(s3_blocks),
        cost_estimate=cost3,
    )(y2, rsrc, scale2p, shift2p, *extra_in)

    return out[:, :O, :] if po else out


# ---------------------------------------------------------------------------
# pure-JAX reference (mirrors the PyTorch module, training-mode BatchNorm,
# gamma=1 / beta=0 as the module's constant_ init)
# ---------------------------------------------------------------------------
def resnet_block_ref(x, params, *, conv_kernel, d_rate, act_fx, in_ch, out_ch):
    def conv1d_same(x, w, b, d):
        k = w.shape[-1]
        total = d * (k - 1)
        lo = total // 2
        y = jax.lax.conv_general_dilated(
            x, w, window_strides=(1,), padding=[(lo, total - lo)],
            rhs_dilation=(d,), dimension_numbers=("NCH", "OIH", "NCH"),
            precision=jax.lax.Precision.HIGHEST,
        )
        return y + b[None, :, None]

    def bn(y):
        mu = y.mean(axis=(0, 2), keepdims=True)
        var = ((y - mu) ** 2).mean(axis=(0, 2), keepdims=True)
        return (y - mu) * jax.lax.rsqrt(var + EPS)

    h = _activation(bn(conv1d_same(x, params["w1"], params["b1"], d_rate)), act_fx)
    h = _activation(bn(conv1d_same(h, params["w2"], params["b2"], d_rate)), act_fx)
    r = x if in_ch == out_ch else bn(conv1d_same(x, params["ws"], params["bs"], d_rate))
    return _activation(h + r, act_fx)


# ---------------------------------------------------------------------------
if __name__ == "__main__":
    CONV_KERNEL, D_RATE = 3, 2
    key = jax.random.PRNGKey(0)
    ks = jax.random.split(key, 10)

    def kaiming_fan_out(k, shape):              # kaiming_normal_, mode='fan_out', relu
        fan_out = shape[0] * shape[2]
        return jax.random.normal(k, shape, jnp.float32) * np.sqrt(2.0 / fan_out)

    def conv_bias(k, out_ch, fan_in):           # default Conv1d bias init
        bound = 1.0 / np.sqrt(fan_in)
        return jax.random.uniform(k, (out_ch,), jnp.float32, -bound, bound)

    def make_params(keys, cin, cout, kk):
        return dict(
            w1=kaiming_fan_out(keys[0], (cout, cin, 1)),
            b1=conv_bias(keys[1], cout, cin * 1),
            w2=kaiming_fan_out(keys[2], (cout, cout, kk)),
            b2=conv_bias(keys[3], cout, cout * kk),
            ws=kaiming_fan_out(keys[4], (cout, cin, 1)),
            bs=conv_bias(keys[5], cout, cin * 1),
        )

    # --- case 1: projection shortcut (Cin != Cout), relu -----------------------
    N, C_IN, C_OUT, L = 2, 4, 8, 16
    params = make_params(ks[:6], C_IN, C_OUT, CONV_KERNEL)
    x = jax.random.normal(ks[6], (N, C_IN, L), jnp.float32)
    ref = resnet_block_ref(x, params, conv_kernel=CONV_KERNEL, d_rate=D_RATE,
                           act_fx="relu", in_ch=C_IN, out_ch=C_OUT)

    # f32 everywhere: tight correctness check
    out_f32 = jax.block_until_ready(resnet_block_forward(
        x, params, conv_kernel=CONV_KERNEL, d_rate=D_RATE, act_fx="relu",
        matmul_dtype=jnp.float32, interstage_dtype=jnp.float32))
    np.testing.assert_allclose(np.asarray(out_f32), np.asarray(ref),
                               rtol=1e-3, atol=1e-3)

    # default perf config: bf16 MXU operands + bf16 inter-stage intermediates
    out_bf16 = jax.block_until_ready(resnet_block_forward(
        x, params, conv_kernel=CONV_KERNEL, d_rate=D_RATE, act_fx="relu"))
    np.testing.assert_allclose(np.asarray(out_bf16), np.asarray(ref),
                               rtol=5e-2, atol=5e-2)

    # --- case 2: identity shortcut (Cin == Cout) --------------------------------
    params_id = make_params(ks[:6], C_OUT, C_OUT, CONV_KERNEL)
    x_id = jax.random.normal(ks[7], (N, C_OUT, L), jnp.float32)
    ref_id = resnet_block_ref(x_id, params_id, conv_kernel=CONV_KERNEL, d_rate=D_RATE,
                              act_fx="relu", in_ch=C_OUT, out_ch=C_OUT)
    out_id = jax.block_until_ready(resnet_block_forward(
        x_id, params_id, conv_kernel=CONV_KERNEL, d_rate=D_RATE, act_fx="relu",
        matmul_dtype=jnp.float32, interstage_dtype=jnp.float32))
    np.testing.assert_allclose(np.asarray(out_id), np.asarray(ref_id),
                               rtol=1e-3, atol=1e-3)

    # --- case 3: out_ch not a multiple of 8 (channel-pad path) + selu ----------
    C_OUT6 = 6
    params6 = make_params(ks[:6], C_IN, C_OUT6, CONV_KERNEL)
    x6 = jax.random.normal(ks[8], (N, C_IN, L), jnp.float32)
    ref6 = resnet_block_ref(x6, params6, conv_kernel=CONV_KERNEL, d_rate=D_RATE,
                            act_fx="selu", in_ch=C_IN, out_ch=C_OUT6)
    out6 = jax.block_until_ready(resnet_block_forward(
        x6, params6, conv_kernel=CONV_KERNEL, d_rate=D_RATE, act_fx="selu",
        matmul_dtype=jnp.float32, interstage_dtype=jnp.float32))
    np.testing.assert_allclose(np.asarray(out6), np.asarray(ref6),
                               rtol=2e-3, atol=2e-3)

    print("KERNEL_OK")
</pallas_src>

<mosaic_0001>
module attributes {stable_mosaic.version = 11 : i64} {
  func.func @_stage1_kernel(%arg0: i32, %arg1: memref<2x4x16xf32, #tpu.memory_space<vmem>>, %arg2: memref<16x4xf32, #tpu.memory_space<vmem>>, %arg3: memref<16x1xf32, #tpu.memory_space<vmem>>, %arg4: memref<2x16x16xf32, #tpu.memory_space<vmem>>, %arg5: memref<2x16x2xf32, #tpu.memory_space<vmem>>) attributes {dimension_semantics = [#tpu.dimension_semantics<parallel>], iteration_bounds = array<i64: 1>, scalar_prefetch = 0 : i64, scratch_operands = 0 : i64, tpu.core_type = #tpu.core_type<tc>, window_params = [{transform_indices = @transform_0, window_bounds = array<i64: 2, 4, 16>}, {pipeline_mode = #tpu.pipeline_mode<synchronous>, transform_indices = @transform_1, window_bounds = array<i64: 16, 4>}, {pipeline_mode = #tpu.pipeline_mode<synchronous>, transform_indices = @transform_2, window_bounds = array<i64: 16, 1>}, {transform_indices = @transform_3, window_bounds = array<i64: 2, 16, 16>}, {transform_indices = @transform_4, window_bounds = array<i64: 2, 16, 2>}]} {
    %c0 = arith.constant 0 : index
    %c0_0 = arith.constant 0 : index
    %0 = vector.load %arg2[%c0, %c0_0] : memref<16x4xf32, #tpu.memory_space<vmem>>, vector<16x4xf32>
    %c0_1 = arith.constant 0 : index
    %c0_2 = arith.constant 0 : index
    %1 = vector.load %arg3[%c0_1, %c0_2] : memref<16x1xf32, #tpu.memory_space<vmem>>, vector<16x1xf32>
    %c0_3 = arith.constant 0 : index
    %c0_4 = arith.constant 0 : index
    %c0_5 = arith.constant 0 : index
    %2 = vector.load %arg1[%c0_3, %c0_4, %c0_5] : memref<2x4x16xf32, #tpu.memory_space<vmem>>, vector<1x4x16xf32>
    %3 = vector.shape_cast %2 : vector<1x4x16xf32> to vector<4x16xf32>
    %cst = arith.constant dense<0.000000e+00> : vector<16x16xf32>
    %4 = tpu.matmul %0, %3, %cst {dimension_numbers = #tpu.dot_dimension_numbers<[1], [0], [0], [1], [0, 0, 1, 1], [], []>} : vector<16x4xf32>, vector<4x16xf32>, vector<16x16xf32> -> vector<16x16xf32>
    %5 = vector.broadcast %1 : vector<16x1xf32> to vector<16x16xf32>
    %6 = arith.addf %4, %5 : vector<16x16xf32>
    %c0_6 = arith.constant 0 : index
    %c0_7 = arith.constant 0 : index
    %c0_8 = arith.constant 0 : index
    %7 = vector.load %arg4[%c0_6, %c0_7, %c0_8] : memref<2x16x16xf32, #tpu.memory_space<vmem>>, vector<1x16x16xf32>
    %8 = vector.shape_cast %7 : vector<1x16x16xf32> to vector<16x16xf32>
    %9 = vector.shape_cast %6 : vector<16x16xf32> to vector<1x16x16xf32>
    tpu.vector_store %arg4[%c0_6, %c0_7, %c0_8], %9 {strides = array<i32>} : memref<2x16x16xf32, #tpu.memory_space<vmem>>, vector<1x16x16xf32>,
    %cst_9 = arith.constant dense<0.000000e+00> : vector<16xf32>
    %10 = vector.multi_reduction <add>, %6, %cst_9 [1] : vector<16x16xf32> to vector<16xf32>
    %11 = vector.shape_cast %10 : vector<16xf32> to vector<16x1xf32>
    %cst_10 = arith.constant 6.250000e-02 : f32
    %12 = vector.broadcast %cst_10 : f32 to vector<16x1xf32>
    %13 = arith.mulf %11, %12 : vector<16x1xf32>
    %14 = vector.broadcast %13 : vector<16x1xf32> to vector<16x16xf32>
    %15 = arith.subf %6, %14 : vector<16x16xf32>
    %16 = arith.mulf %15, %15 : vector<16x16xf32>
    %cst_11 = arith.constant dense<0.000000e+00> : vector<16xf32>
    %17 = vector.multi_reduction <add>, %16, %cst_11 [1] : vector<16x16xf32> to vector<16xf32>
    %18 = vector.shape_cast %17 : vector<16xf32> to vector<16x1xf32>
    %19 = tpu.concatenate %13, %18 in 1 : vector<16x1xf32>, vector<16x1xf32> -> vector<16x2xf32>
    %c0_12 = arith.constant 0 : index
    %c0_13 = arith.constant 0 : index
    %c0_14 = arith.constant 0 : index
    %20 = vector.load %arg5[%c0_12, %c0_13, %c0_14] : memref<2x16x2xf32, #tpu.memory_space<vmem>>, vector<1x16x2xf32>
    %21 = vector.shape_cast %20 : vector<1x16x2xf32> to vector<16x2xf32>
    %22 = vector.shape_cast %19 : vector<16x2xf32> to vector<1x16x2xf32>
    tpu.vector_store %arg5[%c0_12, %c0_13, %c0_14], %22 {strides = array<i32>} : memref<2x16x2xf32, #tpu.memory_space<vmem>>, vector<1x16x2xf32>,
    %c1 = arith.constant 1 : index
    %c0_15 = arith.constant 0 : index
    %c0_16 = arith.constant 0 : index
    %23 = vector.load %arg1[%c1, %c0_15, %c0_16] : memref<2x4x16xf32, #tpu.memory_space<vmem>>, vector<1x4x16xf32>
    %24 = vector.shape_cast %23 : vector<1x4x16xf32> to vector<4x16xf32>
    %cst_17 = arith.constant dense<0.000000e+00> : vector<16x16xf32>
    %25 = tpu.matmul %0, %24, %cst_17 {dimension_numbers = #tpu.dot_dimension_numbers<[1], [0], [0], [1], [0, 0, 1, 1], [], []>} : vector<16x4xf32>, vector<4x16xf32>, vector<16x16xf32> -> vector<16x16xf32>
    %26 = vector.broadcast %1 : vector<16x1xf32> to vector<16x16xf32>
    %27 = arith.addf %25, %26 : vector<16x16xf32>
    %c1_18 = arith.constant 1 : index
    %c0_19 = arith.constant 0 : index
    %c0_20 = arith.constant 0 : index
    %28 = vector.load %arg4[%c1_18, %c0_19, %c0_20] : memref<2x16x16xf32, #tpu.memory_space<vmem>>, vector<1x16x16xf32>
    %29 = vector.shape_cast %28 : vector<1x16x16xf32> to vector<16x16xf32>
    %30 = vector.shape_cast %27 : vector<16x16xf32> to vector<1x16x16xf32>
    tpu.vector_store %arg4[%c1_18, %c0_19, %c0_20], %30 {strides = array<i32>} : memref<2x16x16xf32, #tpu.memory_space<vmem>>, vector<1x16x16xf32>,
    %cst_21 = arith.constant dense<0.000000e+00> : vector<16xf32>
    %31 = vector.multi_reduction <add>, %27, %cst_21 [1] : vector<16x16xf32> to vector<16xf32>
    %32 = vector.shape_cast %31 : vector<16xf32> to vector<16x1xf32>
    %cst_22 = arith.constant 6.250000e-02 : f32
    %33 = vector.broadcast %cst_22 : f32 to vector<16x1xf32>
    %34 = arith.mulf %32, %33 : vector<16x1xf32>
    %35 = vector.broadcast %34 : vector<16x1xf32> to vector<16x16xf32>
    %36 = arith.subf %27, %35 : vector<16x16xf32>
    %37 = arith.mulf %36, %36 : vector<16x16xf32>
    %cst_23 = arith.constant dense<0.000000e+00> : vector<16xf32>
    %38 = vector.multi_reduction <add>, %37, %cst_23 [1] : vector<16x16xf32> to vector<16xf32>
    %39 = vector.shape_cast %38 : vector<16xf32> to vector<16x1xf32>
    %40 = tpu.concatenate %34, %39 in 1 : vector<16x1xf32>, vector<16x1xf32> -> vector<16x2xf32>
    %c1_24 = arith.constant 1 : index
    %c0_25 = arith.constant 0 : index
    %c0_26 = arith.constant 0 : index
    %41 = vector.load %arg5[%c1_24, %c0_25, %c0_26] : memref<2x16x2xf32, #tpu.memory_space<vmem>>, vector<1x16x2xf32>
    %42 = vector.shape_cast %41 : vector<1x16x2xf32> to vector<16x2xf32>
    %43 = vector.shape_cast %40 : vector<16x2xf32> to vector<1x16x2xf32>
    tpu.vector_store %arg5[%c1_24, %c0_25, %c0_26], %43 {strides = array<i32>} : memref<2x16x2xf32, #tpu.memory_space<vmem>>, vector<1x16x2xf32>,
    return
  }
  func.func @transform_0(%arg0: i32) -> (i32, i32, i32) {
    %c0_i32 = arith.constant 0 : i32
    %c0_i32_0 = arith.constant 0 : i32
    %c0_i32_1 = arith.constant 0 : i32
    return %arg0, %c0_i32, %c0_i32_0 : i32, i32, i32
  }
  func.func @transform_1(%arg0: i32) -> (i32, i32) {
    %c0_i32 = arith.constant 0 : i32
    %c0_i32_0 = arith.constant 0 : i32
    %c0_i32_1 = arith.constant 0 : i32
    return %c0_i32, %c0_i32_0 : i32, i32
  }
  func.func @transform_2(%arg0: i32) -> (i32, i32) {
    %c0_i32 = arith.constant 0 : i32
    %c0_i32_0 = arith.constant 0 : i32
    %c0_i32_1 = arith.constant 0 : i32
    return %c0_i32, %c0_i32_0 : i32, i32
  }
  func.func @transform_3(%arg0: i32) -> (i32, i32, i32) {
    %c0_i32 = arith.constant 0 : i32
    %c0_i32_0 = arith.constant 0 : i32
    %c0_i32_1 = arith.constant 0 : i32
    return %arg0, %c0_i32, %c0_i32_0 : i32, i32, i32
  }
  func.func @transform_4(%arg0: i32) -> (i32, i32, i32) {
    %c0_i32 = arith.constant 0 : i32
    %c0_i32_0 = arith.constant 0 : i32
    %c0_i32_1 = arith.constant 0 : i32
    return %arg0, %c0_i32, %c0_i32_0 : i32, i32, i32
  }
}

</mosaic_0001>

<llo_original>
// kernel: tpu_custom_call.1
$region0: #{tpu_custom_call.1}
  #allocation0 [shape = 'u32[]', space=smem, size = 0x4, offset = 0x4, fixed_abs, tag = 'smem constant byte address 0x4 - core index']
  #allocation1 [shape = 'u32[72,128]{1,0:T(1,128)}', space=vmem, size = 0x9000, scoped, tag = 'internal scratch']
  %s0 = inlined_call_operand.vmem [shape: f32[2,4,16], index: 0, kind: input, shape index: {}]
  %s1 = inlined_call_operand.vmem [shape: f32[16,4], index: 1, kind: input, shape index: {}]
  %s2 = inlined_call_operand.vmem [shape: f32[16,1], index: 2, kind: input, shape index: {}]
  %s3 = inlined_call_operand.hbm [shape: f32[2,16,16], index: 3, kind: output, shape index: {0}]
  %s4 = inlined_call_operand.vmem [shape: f32[2,16,2], index: 4, kind: output, shape index: {1}]
  %5 = xla_tuple %s3, %s4
  %s6 = sld [smem:[#allocation0]]
  $region30: #{tpu_custom_call.1} parent=0
    _
  %s8 = ssub.s32 1, %s6
  %s9 = scalar_select 0, %s8, %s6
  $region1: #{tpu_custom_call.1} parent=0
    #allocation2 [shape = 'u8[16384]{0}', space=vmem, size = 0x4000, scoped, tag = 'output window, operand 0, single buffered']
    #allocation3 [shape = 's32[1]{0}', space=sflag, size = 0x4, scoped, tag = 'scoped memory for tpu_custom_call.1']
    %10 = vsyncpa [#allocation3], 0
    // Predicated region
    $region2: #{tpu_custom_call.1} parent=1 // pred_check
      _
    $region3: #{tpu_custom_call.1} parent=1 // pred_check_branch
      %12 = sbr.rel (0) target = $region5
    $region4: #{tpu_custom_call.1} parent=1 // pred_region
      _
    $region5: #{tpu_custom_call.1} parent=1 // pred_fallthru
      _
    // Predicated region
    $region6: #{tpu_custom_call.1} parent=1 // pred_check
      _
    $region7: #{tpu_custom_call.1} parent=1 // pred_check_branch
      %14 = sbr.rel (0) target = $region9
    $region8: #{tpu_custom_call.1} parent=1 // pred_region
      _
    $region9: #{tpu_custom_call.1} parent=1 // pred_fallthru
      _
    // Predicated region
    $region10: #{tpu_custom_call.1} parent=1 // pred_check
      _
    $region11: #{tpu_custom_call.1} parent=1 // pred_check_branch
      %16 = sbr.rel (0) target = $region13
    $region12: #{tpu_custom_call.1} parent=1 // pred_region
      _
    $region13: #{tpu_custom_call.1} parent=1 // pred_fallthru
      _
    %v17 = vld [vmem:[%s1] sm:$0xff]
    %v18 = vld [vmem:[%s1 + $0x8] sm:$0xff]
    %v19 = vld [vmem:[%s2] sm:$0xff]
    %v20 = vld [vmem:[%s2 + $0x8] sm:$0xff]
    %v21 = vld [vmem:[%s0] sm:$0xf]
    %23 = vset.pattern.permute.xlu0 0
    %24 = vperm.xlu0 %23, %v19
    %v25 = vpop.permute.xlu0 %24
    %28 = vset.pattern.permute.xlu0 0
    %29 = vperm.xlu0 %28, %v20
    %v30 = vpop.permute.xlu0 %29
    %vm32 = vcmask 31744
    %v34 = vsel %vm32, %v17, 0
    %v37 = vsel %vm32, %v18, 0
    %vm39 = vcmask 1043456
    %v41 = vsel %vm39, %v21, 0
    %43 = vmatpush.msra.mxu0 0.0
    %44 = vmatpush.msra.mxu0 0.0
    %45 = vmatpush.msra.mxu0 0.0
    %46 = vmatpush.msra.mxu0 0.0
    %47 = vmatpush.msra.mxu0 0.0
    %48 = vmatpush.msra.mxu0 0.0
    %49 = vmatpush.msra.mxu0 0.0
    %50 = vmatpush.msra.mxu0 0.0
    %51 = vmatpush.msra.mxu0 0.0
    %52 = vmatpush.msra.mxu0 0.0
    %53 = vmatpush.msra.mxu0 0.0
    %54 = vmatpush.msra.mxu0 0.0
    %55 = vmatpush.msra.mxu0 0.0
    %56 = vmatpush.msra.mxu0 0.0
    %57 = vmatpush.msra.mxu0 0.0
    %58 = vmatpush.msra.mxu0 %v41
    %59 = vmatmul.f32.gmra.mxu0 %v34
    %v60 = vpop.f32.mrf.mxu0
    %v61 = vadd.f32 %v25, %v60
    %62 = vmatmul.f32.gmra.mxu0 %v37
    %v63 = vpop.f32.mrf.mxu0
    %v64 = vadd.f32 %v30, %v63
    %65 = vdwg.mxu0
    %vm66 = vcmask 130048
    %67 = vst.msk [vmem:[#allocation2] sm:$0xff] %vm66, %v61
    %68 = vst.msk [vmem:[#allocation2 + $0x8] sm:$0xff] %vm66, %v64
    %v69 = vsel %vm66, %v61, 0.0
    %70 = vadd.xlane.f32.xlu0 %v69
    %v71 = vpop.xlane.xlu0 %70
    %v72 = vsel %vm66, %v64, 0.0
    %73 = vadd.xlane.f32.xlu0 %v72
    %v74 = vpop.xlane.xlu0 %73
    %v75 = vmul.f32 %v71, 0.0625
    %v76 = vmul.f32 %v74, 0.0625
    %v77 = vsub.f32 %v61, %v75
    %v78 = vsub.f32 %v64, %v76
    %v79 = vmul.f32 %v77, %v77
    %v80 = vmul.f32 %v78, %v78
    %v81 = vsel %vm66, %v79, 0.0
    %82 = vadd.xlane.f32.xlu0 %v81
    %v83 = vpop.xlane.xlu0 %82
    %v84 = vsel %vm66, %v80, 0.0
    %85 = vadd.xlane.f32.xlu0 %v84
    %v86 = vpop.xlane.xlu0 %85
    %vm87 = vcmask 7168
    %v88 = vsel %vm87, %v75, %v83
    %v89 = vsel %vm87, %v76, %v86
    %vm90 = vcmask 15360
    %91 = vst.msk [vmem:[%s4] sm:$0xff] %vm90, %v88
    %92 = vst.msk [vmem:[%s4 + $0x8] sm:$0xff] %vm90, %v89
    %s93 = scalar_lea.vmem %s0, 4
    %v94 = vld [vmem:[%s93] sm:$0xf]
    %v96 = vsel %vm39, %v94, 0
    %98 = vmatpush.msra.mxu0 0.0
    %99 = vmatpush.msra.mxu0 0.0
    %100 = vmatpush.msra.mxu0 0.0
    %101 = vmatpush.msra.mxu0 0.0
    %102 = vmatpush.msra.mxu0 0.0
    %103 = vmatpush.msra.mxu0 0.0
    %104 = vmatpush.msra.mxu0 0.0
    %105 = vmatpush.msra.mxu0 0.0
    %106 = vmatpush.msra.mxu0 0.0
    %107 = vmatpush.msra.mxu0 0.0
    %108 = vmatpush.msra.mxu0 0.0
    %109 = vmatpush.msra.mxu0 0.0
    %110 = vmatpush.msra.mxu0 0.0
    %111 = vmatpush.msra.mxu0 0.0
    %112 = vmatpush.msra.mxu0 0.0
    %113 = vmatpush.msra.mxu0 %v96
    %114 = vmatmul.f32.gmra.mxu0 %v34
    %v115 = vpop.f32.mrf.mxu0
    %v116 = vadd.f32 %v25, %v115
    %117 = vmatmul.f32.gmra.mxu0 %v37
    %v118 = vpop.f32.mrf.mxu0
    %v119 = vadd.f32 %v30, %v118
    %120 = vdwg.mxu0
    %s121 = scalar_lea.vmem [#allocation2], 16
    %122 = vst.msk [vmem:[%s121] sm:$0xff] %vm66, %v116
    %123 = vst.msk [vmem:[%s121 + $0x8] sm:$0xff] %vm66, %v119
    %v124 = vsel %vm66, %v116, 0.0
    %125 = vadd.xlane.f32.xlu0 %v124
    %v126 = vpop.xlane.xlu0 %125
    %v127 = vsel %vm66, %v119, 0.0
    %128 = vadd.xlane.f32.xlu0 %v127
    %v129 = vpop.xlane.xlu0 %128
    %v130 = vmul.f32 %v126, 0.0625
    %v131 = vmul.f32 %v129, 0.0625
    %v132 = vsub.f32 %v116, %v130
    %v133 = vsub.f32 %v119, %v131
    %v134 = vmul.f32 %v132, %v132
    %v135 = vmul.f32 %v133, %v133
    %v136 = vsel %vm66, %v134, 0.0
    %137 = vadd.xlane.f32.xlu0 %v136
    %v138 = vpop.xlane.xlu0 %137
    %v139 = vsel %vm66, %v135, 0.0
    %140 = vadd.xlane.f32.xlu0 %v139
    %v141 = vpop.xlane.xlu0 %140
    %v142 = vsel %vm87, %v130, %v138
    %v143 = vsel %vm87, %v131, %v141
    %s144 = scalar_lea.vmem %s4, 16
    %145 = vst.msk [vmem:[%s144] sm:$0xff] %vm90, %v142
    %146 = vst.msk [vmem:[%s144 + $0x8] sm:$0xff] %vm90, %v143
    // Predicated region
    $region14: #{tpu_custom_call.1} parent=1 // pred_check
      _
    $region15: #{tpu_custom_call.1} parent=1 // pred_check_branch
      %148 = sbr.rel (0) target = $region17
    $region16: #{tpu_custom_call.1} parent=1 // pred_region
      %150 = vsyncadd [#allocation3], 0
      %s151 = sshll.u32 [#allocation2], 4
      %s152 = int_to_ptr.vmem [resolvable:$true] %s151
      %s153 = sshll.u32 %s3, 4
      %s154 = int_to_ptr.hbm [resolvable:$true] %s153
      %159 = dma.vmem_to_hbm [thread:$0]  %s152, 512, %s154, [#allocation3], 128, 128, 8
    $region17: #{tpu_custom_call.1} parent=1 // pred_fallthru
      _
    // Predicated region
    $region18: #{tpu_custom_call.1} parent=1 // pred_check
      _
    $region19: #{tpu_custom_call.1} parent=1 // pred_check_branch
      %161 = sbr.rel (0) target = $region21
    $region20: #{tpu_custom_call.1} parent=1 // pred_region
      _
    $region21: #{tpu_custom_call.1} parent=1 // pred_fallthru
      _
    // Predicated region
    $region22: #{tpu_custom_call.1} parent=1 // pred_check
      _
    $region23: #{tpu_custom_call.1} parent=1 // pred_check_branch
      %163 = sbr.rel (0) target = $region25
    $region24: #{tpu_custom_call.1} parent=1 // pred_region
      %165 = dma.done [#allocation3], 512
    $region25: #{tpu_custom_call.1} parent=1 // pred_fallthru
      _
    // Predicated region
    $region26: #{tpu_custom_call.1} parent=1 // pred_check
      _
    $region27: #{tpu_custom_call.1} parent=1 // pred_check_branch
      %167 = sbr.rel (0) target = $region29
    $region28: #{tpu_custom_call.1} parent=1 // pred_region
      _
    $region29: #{tpu_custom_call.1} parent=1 // pred_fallthru
      _
    %168 = vsyncpa [#allocation3], 1

</llo_original>
